<compile_context>
chip_gen: v7x
topology: tpu7x:2x2x1
jax: 0.10.0
libtpu: 0.0.40
codegen_flags: <defaults>
</compile_context>

<pallas_src>
import functools

import jax
import jax.numpy as jnp
from jax import lax
from jax.experimental import pallas as pl
from jax.experimental.pallas import tpu as pltpu

MARGIN = 1.0
CONF_PENALTY = 0.1
PAIRWISE_EPS = 1e-6          # F.pairwise_distance default eps
COSINE_EPS = 1e-8            # F.cosine_similarity default eps
_COS_EPS_SQ = COSINE_EPS * COSINE_EPS

# lane slots of the per-block partial-sum vector (lanes 0..5 of sublane 0)
_S_POS_DIST, _S_POS_OVER, _S_POS_CNT, _S_HARD_SUM, _S_HARD_CNT, _S_NEG_OVER = range(6)

_DEF_CHUNK = 256                       # inner fori_loop row-chunk (bounds f32 temporaries)
_TARGET_BLOCK_BYTES = 2 * 1024 * 1024  # ~2 MiB per input DMA block (>=85% of HBM roofline)


def _round_up(x, m):
    return ((x + m - 1) // m) * m


def _vmem_capacity_bytes():
    try:
        return int(pltpu.get_tpu_info().vmem_capacity_bytes)
    except Exception:
        return 64 * 1024 * 1024        # conservative fallback: v7x per-TensorCore VMEM


def _pick_tiles(batch, feat, itemsize, tile_b=None):
    """Returns (tb, chunk, vmem_limit_bytes)."""
    phys = _vmem_capacity_bytes()
    # per-generation scoped limit: v7x (64 MiB phys) -> 48 MiB; v5e/v6e (128 MiB) -> 96 MiB
    vmem_limit = min(phys * 3 // 4, 96 * 1024 * 1024)
    budget = vmem_limit - 8 * 1024 * 1024       # headroom for compiler scratch

    batch8 = _round_up(max(batch, 8), 8)

    if tile_b is not None:
        tb = min(_round_up(tile_b, 8), batch8)
        chunk = min(_DEF_CHUNK, tb)
        tb = _round_up(tb, chunk)
        return tb, chunk, vmem_limit

    # chunk-local f32 intermediates: ~7 full (chunk, D) temps + ~12 lane-padded (chunk, 1) columns
    per_chunk_row = 7 * feat * 4 + 12 * 512
    chunk = min(_DEF_CHUNK, batch8)
    chunk = max(8, min(chunk, (budget // 3) // per_chunk_row // 8 * 8))

    # per-row resident cost: 2 inputs x 2 pipeline buffers + lane-padded f32 label (2 buffers)
    per_row = 4 * feat * itemsize + 2 * 512
    tb_vmem = max(chunk, (budget - chunk * per_chunk_row) // per_row)
    tb_target = max(chunk, _TARGET_BLOCK_BYTES // (feat * itemsize))
    tb = min(tb_vmem, tb_target)

    n_chunks = -(-batch8 // chunk)
    if n_chunks >= 2:
        # keep >= 2 grid steps when the batch allows it (v7x megacore shards the parallel axis)
        tb = min(tb, ((n_chunks + 1) // 2) * chunk)
    tb = max(chunk, tb // chunk * chunk)
    tb = min(tb, n_chunks * chunk)
    return tb, chunk, vmem_limit


@functools.lru_cache(maxsize=None)
def _make_kernel(tb, chunk, margin):
    n_chunks = tb // chunk

    def kernel(nvalid_ref, o1_ref, o2_ref, lab_ref, out_ref):
        n_valid = nvalid_ref[0]                      # SMEM scalar (prefetched)
        base = pl.program_id(0) * tb

        def body(c, carry):
            r0 = pl.multiple_of(c * chunk, chunk)
            x1 = o1_ref[pl.ds(r0, chunk), :].astype(jnp.float32)   # (chunk, D)
            x2 = o2_ref[pl.ds(r0, chunk), :].astype(jnp.float32)   # (chunk, D)
            lab = lab_ref[pl.ds(r0, chunk), :]                     # (chunk, 1) f32

            # validity mask for padded rows of the (possibly padded) batch
            rows = base + r0 + lax.broadcasted_iota(jnp.int32, (chunk, 1), 0)
            valid = (rows < n_valid).astype(jnp.float32)           # (chunk, 1)

            # euclidean distance (pairwise_distance adds eps to the difference)
            diff = x1 - x2 + PAIRWISE_EPS
            dist = jnp.sqrt(jnp.sum(diff * diff, axis=-1, keepdims=True))

            # cosine similarity; rsqrt keeps the transcendentals on the (otherwise idle) EUP
            dot = jnp.sum(x1 * x2, axis=-1, keepdims=True)
            ss1 = jnp.sum(x1 * x1, axis=-1, keepdims=True)
            ss2 = jnp.sum(x2 * x2, axis=-1, keepdims=True)
            cos = (dot * lax.rsqrt(jnp.maximum(ss1, _COS_EPS_SQ))
                       * lax.rsqrt(jnp.maximum(ss2, _COS_EPS_SQ)))

            pos = jnp.where(lab != 0.0, valid, 0.0)
            neg = valid - pos
            hard = jnp.where(dist < margin, neg, 0.0)              # hard => dist < margin

            def csum(x):                                           # (chunk,1) -> (1,1)
                return jnp.sum(x, axis=0, keepdims=True)

            upd = (
                csum(dist * pos),                                  # _S_POS_DIST
                csum(jnp.maximum(cos - 0.9, 0.0) * pos),           # _S_POS_OVER
                csum(pos),                                         # _S_POS_CNT
                csum((margin - dist) * hard),                      # _S_HARD_SUM (relu dropped)
                csum(hard),                                        # _S_HARD_CNT
                csum(jnp.maximum(0.3 - cos, 0.0) * neg),           # _S_NEG_OVER
            )
            return tuple(a + u for a, u in zip(carry, upd))

        init = tuple(jnp.zeros((1, 1), jnp.float32) for _ in range(6))
        if n_chunks == 1:
            totals = body(jnp.int32(0), init)
        else:
            totals = lax.fori_loop(0, n_chunks, body, init, unroll=(n_chunks <= 4))

        # Pack the 6 block totals onto lanes 0..5 of a full (8,128) vreg -> unmasked,
        # lane-dense store, done once per grid step (hoisted out of the chunk loop).
        lane = lax.broadcasted_iota(jnp.int32, (8, 128), 1)
        block = jnp.zeros((8, 128), jnp.float32)
        for slot, v in enumerate(totals):
            block = block + jnp.where(lane == slot, v, 0.0)
        out_ref[...] = block.reshape(1, 8, 128)

    return kernel


def online_contrastive_loss(output1, output2, label, *, n_valid=None,
                            margin=MARGIN, confidence_penalty=CONF_PENALTY, tile_b=None):
    """OnlineContrastiveLoss forward pass.

    output1, output2: (B, D) float32 or bfloat16 embeddings.  bfloat16 is encouraged: the
      kernel is HBM-bandwidth bound and casts tiles to f32 in-register (required on v5e
      anyway), so bf16 inputs halve HBM traffic with no effect on the f32 loss math.
    label: (B,) or (B, 1); nonzero = positive pair.
    n_valid: optional real row count when the caller pre-pads the batch to a fixed size.
      It is delivered to the kernel via SMEM scalar-prefetch, so varying it does NOT
      retrace/recompile.  Defaults to B.
    Returns a scalar float32 loss.
    """
    B, D = output1.shape
    if n_valid is None:
        n_valid = B
    nvalid_arr = jnp.asarray(n_valid, jnp.int32).reshape((1,))
    label2d = jnp.reshape(label, (B, 1)).astype(jnp.float32)

    itemsize = jnp.dtype(output1.dtype).itemsize
    tb, chunk, vmem_limit = _pick_tiles(B, D, itemsize, tile_b)
    Bp = _round_up(B, tb)
    G = Bp // tb
    if Bp != B:                          # pad ragged batch; pad rows masked via n_valid
        pad = Bp - B
        output1 = jnp.pad(output1, ((0, pad), (0, 0)))
        output2 = jnp.pad(output2, ((0, pad), (0, 0)))
        label2d = jnp.pad(label2d, ((0, pad), (0, 0)))

    cost = pl.CostEstimate(
        flops=int(8 * Bp * D),
        transcendentals=int(3 * Bp),
        bytes_accessed=int(2 * Bp * D * itemsize + Bp * 4 + G * 8 * 128 * 4),
    )

    partials = pl.pallas_call(
        _make_kernel(int(tb), int(chunk), float(margin)),
        out_shape=jax.ShapeDtypeStruct((G, 8, 128), jnp.float32),
        grid_spec=pltpu.PrefetchScalarGridSpec(
            num_scalar_prefetch=1,
            grid=(G,),
            in_specs=[
                pl.BlockSpec((tb, D), lambda i, nv: (i, 0)),
                pl.BlockSpec((tb, D), lambda i, nv: (i, 0)),
                pl.BlockSpec((tb, 1), lambda i, nv: (i, 0)),
            ],
            out_specs=pl.BlockSpec((1, 8, 128), lambda i, nv: (i, 0, 0)),
        ),
        compiler_params=pltpu.CompilerParams(
            dimension_semantics=("parallel",),        # independent blocks -> megacore-shardable
            vmem_limit_bytes=int(vmem_limit),
        ),
        cost_estimate=cost,
    )(nvalid_arr, output1, output2, label2d)

    # Tiny epilogue in JAX on GLOBAL sums/counts (required for correctness when batch-tiled).
    totals = jnp.sum(partials[:, 0, :], axis=0)       # (128,)
    pos_dist = totals[_S_POS_DIST]
    pos_over = totals[_S_POS_OVER]
    pos_cnt = totals[_S_POS_CNT]
    hard_sum = totals[_S_HARD_SUM]
    hard_cnt = totals[_S_HARD_CNT]
    neg_over = totals[_S_NEG_OVER]
    neg_cnt = jnp.maximum(jnp.asarray(n_valid, jnp.float32) - pos_cnt, 0.0)

    pos_loss = jnp.where(
        pos_cnt > 0.0,
        pos_dist / jnp.maximum(pos_cnt, 1.0)
        + confidence_penalty * pos_over / jnp.maximum(pos_cnt, 1.0),
        0.0,
    )
    neg_loss = jnp.where(
        hard_cnt > 0.0,
        hard_sum / jnp.maximum(hard_cnt, 1.0)
        + confidence_penalty * neg_over / jnp.maximum(neg_cnt, 1.0),
        0.0,
    )
    return pos_loss + neg_loss


def _reference(output1, output2, label):
    # pure-JAX reference mirroring the PyTorch forward
    x1 = output1.astype(jnp.float32)
    x2 = output2.astype(jnp.float32)
    lab = jnp.reshape(label, (-1,)).astype(jnp.float32)
    diff = x1 - x2 + PAIRWISE_EPS
    dist = jnp.sqrt(jnp.sum(diff * diff, axis=-1))
    dot = jnp.sum(x1 * x2, axis=-1)
    n1 = jnp.sqrt(jnp.sum(x1 * x1, axis=-1))
    n2 = jnp.sqrt(jnp.sum(x2 * x2, axis=-1))
    cos = dot / (jnp.maximum(n1, COSINE_EPS) * jnp.maximum(n2, COSINE_EPS))
    pos_f = (lab != 0.0).astype(jnp.float32)
    neg_f = 1.0 - pos_f
    pos_cnt = jnp.sum(pos_f)
    neg_cnt = jnp.sum(neg_f)
    pos_loss = jnp.where(
        pos_cnt > 0,
        jnp.sum(dist * pos_f) / jnp.maximum(pos_cnt, 1.0)
        + CONF_PENALTY * jnp.sum(jnp.maximum(cos - 0.9, 0.0) * pos_f) / jnp.maximum(pos_cnt, 1.0),
        0.0,
    )
    hard = neg_f * (dist < MARGIN).astype(jnp.float32)
    hard_cnt = jnp.sum(hard)
    neg_loss = jnp.where(
        hard_cnt > 0,
        jnp.sum(jnp.maximum(MARGIN - dist, 0.0) * hard) / jnp.maximum(hard_cnt, 1.0)
        + CONF_PENALTY * jnp.sum(jnp.maximum(0.3 - cos, 0.0) * neg_f) / jnp.maximum(neg_cnt, 1.0),
        0.0,
    )
    return pos_loss + neg_loss


if __name__ == "__main__":
    key = jax.random.PRNGKey(0)
    k1, k2, k3, k4 = jax.random.split(key, 4)

    # 1) multi-tile path with an explicit small tile (grid of 3 blocks, 1 chunk per block);
    #    inputs scaled down so hard negatives (dist < margin) actually occur.
    B, D = 24, 32
    o1 = 0.1 * jax.random.normal(k1, (B, D), dtype=jnp.float32)
    o2 = 0.1 * jax.random.normal(k2, (B, D), dtype=jnp.float32)
    lab = jnp.tile(jnp.array([1.0, 0.0], dtype=jnp.float32), B // 2).reshape(B, 1)
    loss = online_contrastive_loss(o1, o2, lab, tile_b=8)
    jax.block_until_ready(loss)
    ref = _reference(o1, o2, lab)
    assert jnp.allclose(loss, ref, atol=1e-5, rtol=1e-5), (loss, ref)

    # 2) ragged batch (padding + in-kernel validity masking), automatic tile sizing
    B2 = 13
    o1b = jax.random.normal(jax.random.PRNGKey(1), (B2, D), dtype=jnp.float32)
    o2b = jax.random.normal(jax.random.PRNGKey(2), (B2, D), dtype=jnp.float32)
    lab_b = (jnp.arange(B2) % 2).astype(jnp.float32)
    loss2 = online_contrastive_loss(o1b, o2b, lab_b)
    jax.block_until_ready(loss2)
    ref2 = _reference(o1b, o2b, lab_b)
    assert jnp.allclose(loss2, ref2, atol=1e-5, rtol=1e-5), (loss2, ref2)

    # 3) auto-sized path exercising multiple inner chunks per block and >= 2 grid steps
    B3 = 600
    o1c = 0.1 * jax.random.normal(k3, (B3, D), dtype=jnp.float32)
    o2c = 0.1 * jax.random.normal(k4, (B3, D), dtype=jnp.float32)
    lab_c = (jax.random.uniform(jax.random.PRNGKey(3), (B3,)) > 0.5).astype(jnp.float32)
    loss3 = online_contrastive_loss(o1c, o2c, lab_c)
    jax.block_until_ready(loss3)
    ref3 = _reference(o1c, o2c, lab_c)
    assert jnp.allclose(loss3, ref3, atol=1e-4, rtol=1e-4), (loss3, ref3)

    print("KERNEL_OK")
</pallas_src>

<mosaic_0001>
module attributes {stable_mosaic.version = 11 : i64} {
  func.func @kernel(%arg0: i32, %arg1: memref<1xi32, #tpu.memory_space<smem>>, %arg2: memref<8x32xf32, #tpu.memory_space<vmem>>, %arg3: memref<8x32xf32, #tpu.memory_space<vmem>>, %arg4: memref<8x1xf32, #tpu.memory_space<vmem>>, %arg5: memref<1x8x128xf32, #tpu.memory_space<vmem>>) attributes {dimension_semantics = [#tpu.dimension_semantics<parallel>], iteration_bounds = array<i64: 3>, scalar_prefetch = 1 : i64, scratch_operands = 0 : i64, tpu.core_type = #tpu.core_type<tc>, window_params = [{transform_indices = @transform_0, window_bounds = array<i64: 8, 32>}, {transform_indices = @transform_1, window_bounds = array<i64: 8, 32>}, {transform_indices = @transform_2, window_bounds = array<i64: 8, 1>}, {transform_indices = @transform_3, window_bounds = array<i64: 1, 8, 128>}]} {
    %c0 = arith.constant 0 : index
    %0 = memref.load %arg1[%c0] : memref<1xi32, #tpu.memory_space<smem>>
    %c8_i32 = arith.constant 8 : i32
    %1 = arith.muli %arg0, %c8_i32 : i32
    %cst = arith.constant 0.000000e+00 : f32
    %2 = vector.broadcast %cst : f32 to vector<1x1xf32>
    %cst_0 = arith.constant 0.000000e+00 : f32
    %3 = vector.broadcast %cst_0 : f32 to vector<1x1xf32>
    %cst_1 = arith.constant 0.000000e+00 : f32
    %4 = vector.broadcast %cst_1 : f32 to vector<1x1xf32>
    %cst_2 = arith.constant 0.000000e+00 : f32
    %5 = vector.broadcast %cst_2 : f32 to vector<1x1xf32>
    %cst_3 = arith.constant 0.000000e+00 : f32
    %6 = vector.broadcast %cst_3 : f32 to vector<1x1xf32>
    %cst_4 = arith.constant 0.000000e+00 : f32
    %7 = vector.broadcast %cst_4 : f32 to vector<1x1xf32>
    %c0_i32 = arith.constant 0 : i32
    %c8_i32_5 = arith.constant 8 : i32
    %8 = arith.muli %c0_i32, %c8_i32_5 : i32
    %9 = tpu.assume_multiple %8, 8 : i32
    %10 = arith.index_cast %9 : i32 to index
    %c0_6 = arith.constant 0 : index
    %11 = vector.load %arg2[%10, %c0_6] : memref<8x32xf32, #tpu.memory_space<vmem>>, vector<8x32xf32>
    %12 = arith.index_cast %9 : i32 to index
    %c0_7 = arith.constant 0 : index
    %13 = vector.load %arg3[%12, %c0_7] : memref<8x32xf32, #tpu.memory_space<vmem>>, vector<8x32xf32>
    %14 = arith.index_cast %9 : i32 to index
    %c0_8 = arith.constant 0 : index
    %15 = vector.load %arg4[%14, %c0_8] : memref<8x1xf32, #tpu.memory_space<vmem>>, vector<8x1xf32>
    %16 = arith.addi %1, %9 : i32
    %17 = tpu.iota {dimensions = array<i32: 0>} : vector<8x1xi32>
    %18 = vector.broadcast %16 : i32 to vector<8x1xi32>
    %19 = arith.addi %18, %17 : vector<8x1xi32>
    %20 = vector.broadcast %0 : i32 to vector<8x1xi32>
    %21 = arith.cmpi slt, %19, %20 : vector<8x1xi32>
    %22 = arith.extui %21 : vector<8x1xi1> to vector<8x1xi32>
    %23 = arith.sitofp %22 : vector<8x1xi32> to vector<8x1xf32>
    %24 = arith.subf %11, %13 : vector<8x32xf32>
    %cst_9 = arith.constant 9.99999997E-7 : f32
    %25 = vector.broadcast %cst_9 : f32 to vector<8x32xf32>
    %26 = arith.addf %24, %25 : vector<8x32xf32>
    %27 = arith.mulf %26, %26 : vector<8x32xf32>
    %cst_10 = arith.constant dense<0.000000e+00> : vector<8xf32>
    %28 = vector.multi_reduction <add>, %27, %cst_10 [1] : vector<8x32xf32> to vector<8xf32>
    %29 = vector.shape_cast %28 : vector<8xf32> to vector<8x1xf32>
    %30 = math.sqrt %29 : vector<8x1xf32>
    %31 = arith.mulf %11, %13 : vector<8x32xf32>
    %cst_11 = arith.constant dense<0.000000e+00> : vector<8xf32>
    %32 = vector.multi_reduction <add>, %31, %cst_11 [1] : vector<8x32xf32> to vector<8xf32>
    %33 = vector.shape_cast %32 : vector<8xf32> to vector<8x1xf32>
    %34 = arith.mulf %11, %11 : vector<8x32xf32>
    %cst_12 = arith.constant dense<0.000000e+00> : vector<8xf32>
    %35 = vector.multi_reduction <add>, %34, %cst_12 [1] : vector<8x32xf32> to vector<8xf32>
    %36 = vector.shape_cast %35 : vector<8xf32> to vector<8x1xf32>
    %37 = arith.mulf %13, %13 : vector<8x32xf32>
    %cst_13 = arith.constant dense<0.000000e+00> : vector<8xf32>
    %38 = vector.multi_reduction <add>, %37, %cst_13 [1] : vector<8x32xf32> to vector<8xf32>
    %39 = vector.shape_cast %38 : vector<8xf32> to vector<8x1xf32>
    %cst_14 = arith.constant 1.000000e-16 : f32
    %40 = vector.broadcast %cst_14 : f32 to vector<8x1xf32>
    %41 = arith.maximumf %36, %40 : vector<8x1xf32>
    %42 = math.rsqrt %41 : vector<8x1xf32>
    %43 = arith.mulf %33, %42 : vector<8x1xf32>
    %cst_15 = arith.constant 1.000000e-16 : f32
    %44 = vector.broadcast %cst_15 : f32 to vector<8x1xf32>
    %45 = arith.maximumf %39, %44 : vector<8x1xf32>
    %46 = math.rsqrt %45 : vector<8x1xf32>
    %47 = arith.mulf %43, %46 : vector<8x1xf32>
    %cst_16 = arith.constant 0.000000e+00 : f32
    %48 = vector.broadcast %cst_16 : f32 to vector<8x1xf32>
    %49 = arith.cmpf one, %15, %48 : vector<8x1xf32>
    %cst_17 = arith.constant 0.000000e+00 : f32
    %50 = vector.broadcast %cst_17 : f32 to vector<8x1xf32>
    %51 = arith.select %49, %23, %50 : vector<8x1xi1>, vector<8x1xf32>
    %52 = arith.subf %23, %51 : vector<8x1xf32>
    %cst_18 = arith.constant 1.000000e+00 : f32
    %53 = vector.broadcast %cst_18 : f32 to vector<8x1xf32>
    %54 = arith.cmpf olt, %30, %53 : vector<8x1xf32>
    %cst_19 = arith.constant 0.000000e+00 : f32
    %55 = vector.broadcast %cst_19 : f32 to vector<8x1xf32>
    %56 = arith.select %54, %52, %55 : vector<8x1xi1>, vector<8x1xf32>
    %57 = arith.mulf %30, %51 : vector<8x1xf32>
    %cst_20 = arith.constant dense<0.000000e+00> : vector<1xf32>
    %58 = vector.multi_reduction <add>, %57, %cst_20 [0] : vector<8x1xf32> to vector<1xf32>
    %59 = vector.shape_cast %58 : vector<1xf32> to vector<1x1xf32>
    %cst_21 = arith.constant 0.899999976 : f32
    %60 = vector.broadcast %cst_21 : f32 to vector<8x1xf32>
    %61 = arith.subf %47, %60 : vector<8x1xf32>
    %cst_22 = arith.constant 0.000000e+00 : f32
    %62 = vector.broadcast %cst_22 : f32 to vector<8x1xf32>
    %63 = arith.maximumf %61, %62 : vector<8x1xf32>
    %64 = arith.mulf %63, %51 : vector<8x1xf32>
    %cst_23 = arith.constant dense<0.000000e+00> : vector<1xf32>
    %65 = vector.multi_reduction <add>, %64, %cst_23 [0] : vector<8x1xf32> to vector<1xf32>
    %66 = vector.shape_cast %65 : vector<1xf32> to vector<1x1xf32>
    %cst_24 = arith.constant dense<0.000000e+00> : vector<1xf32>
    %67 = vector.multi_reduction <add>, %51, %cst_24 [0] : vector<8x1xf32> to vector<1xf32>
    %68 = vector.shape_cast %67 : vector<1xf32> to vector<1x1xf32>
    %cst_25 = arith.constant 1.000000e+00 : f32
    %69 = vector.broadcast %cst_25 : f32 to vector<8x1xf32>
    %70 = arith.subf %69, %30 : vector<8x1xf32>
    %71 = arith.mulf %70, %56 : vector<8x1xf32>
    %cst_26 = arith.constant dense<0.000000e+00> : vector<1xf32>
    %72 = vector.multi_reduction <add>, %71, %cst_26 [0] : vector<8x1xf32> to vector<1xf32>
    %73 = vector.shape_cast %72 : vector<1xf32> to vector<1x1xf32>
    %cst_27 = arith.constant dense<0.000000e+00> : vector<1xf32>
    %74 = vector.multi_reduction <add>, %56, %cst_27 [0] : vector<8x1xf32> to vector<1xf32>
    %75 = vector.shape_cast %74 : vector<1xf32> to vector<1x1xf32>
    %cst_28 = arith.constant 3.000000e-01 : f32
    %76 = vector.broadcast %cst_28 : f32 to vector<8x1xf32>
    %77 = arith.subf %76, %47 : vector<8x1xf32>
    %cst_29 = arith.constant 0.000000e+00 : f32
    %78 = vector.broadcast %cst_29 : f32 to vector<8x1xf32>
    %79 = arith.maximumf %77, %78 : vector<8x1xf32>
    %80 = arith.mulf %79, %52 : vector<8x1xf32>
    %cst_30 = arith.constant dense<0.000000e+00> : vector<1xf32>
    %81 = vector.multi_reduction <add>, %80, %cst_30 [0] : vector<8x1xf32> to vector<1xf32>
    %82 = vector.shape_cast %81 : vector<1xf32> to vector<1x1xf32>
    %83 = arith.addf %2, %59 : vector<1x1xf32>
    %84 = arith.addf %3, %66 : vector<1x1xf32>
    %85 = arith.addf %4, %68 : vector<1x1xf32>
    %86 = arith.addf %5, %73 : vector<1x1xf32>
    %87 = arith.addf %6, %75 : vector<1x1xf32>
    %88 = arith.addf %7, %82 : vector<1x1xf32>
    %89 = tpu.iota {dimensions = array<i32: 1>} : vector<8x128xi32>
    %cst_31 = arith.constant 0.000000e+00 : f32
    %90 = vector.broadcast %cst_31 : f32 to vector<8x128xf32>
    %c0_i32_32 = arith.constant 0 : i32
    %91 = vector.broadcast %c0_i32_32 : i32 to vector<8x128xi32>
    %92 = arith.cmpi eq, %89, %91 : vector<8x128xi32>
    %cst_33 = arith.constant 0.000000e+00 : f32
    %93 = vector.shape_cast %83 : vector<1x1xf32> to vector<1x1xf32>
    %94 = vector.broadcast %93 : vector<1x1xf32> to vector<8x128xf32>
    %95 = vector.broadcast %cst_33 : f32 to vector<8x128xf32>
    %96 = arith.select %92, %94, %95 : vector<8x128xi1>, vector<8x128xf32>
    %97 = arith.addf %90, %96 : vector<8x128xf32>
    %c1_i32 = arith.constant 1 : i32
    %98 = vector.broadcast %c1_i32 : i32 to vector<8x128xi32>
    %99 = arith.cmpi eq, %89, %98 : vector<8x128xi32>
    %cst_34 = arith.constant 0.000000e+00 : f32
    %100 = vector.shape_cast %84 : vector<1x1xf32> to vector<1x1xf32>
    %101 = vector.broadcast %100 : vector<1x1xf32> to vector<8x128xf32>
    %102 = vector.broadcast %cst_34 : f32 to vector<8x128xf32>
    %103 = arith.select %99, %101, %102 : vector<8x128xi1>, vector<8x128xf32>
    %104 = arith.addf %97, %103 : vector<8x128xf32>
    %c2_i32 = arith.constant 2 : i32
    %105 = vector.broadcast %c2_i32 : i32 to vector<8x128xi32>
    %106 = arith.cmpi eq, %89, %105 : vector<8x128xi32>
    %cst_35 = arith.constant 0.000000e+00 : f32
    %107 = vector.shape_cast %85 : vector<1x1xf32> to vector<1x1xf32>
    %108 = vector.broadcast %107 : vector<1x1xf32> to vector<8x128xf32>
    %109 = vector.broadcast %cst_35 : f32 to vector<8x128xf32>
    %110 = arith.select %106, %108, %109 : vector<8x128xi1>, vector<8x128xf32>
    %111 = arith.addf %104, %110 : vector<8x128xf32>
    %c3_i32 = arith.constant 3 : i32
    %112 = vector.broadcast %c3_i32 : i32 to vector<8x128xi32>
    %113 = arith.cmpi eq, %89, %112 : vector<8x128xi32>
    %cst_36 = arith.constant 0.000000e+00 : f32
    %114 = vector.shape_cast %86 : vector<1x1xf32> to vector<1x1xf32>
    %115 = vector.broadcast %114 : vector<1x1xf32> to vector<8x128xf32>
    %116 = vector.broadcast %cst_36 : f32 to vector<8x128xf32>
    %117 = arith.select %113, %115, %116 : vector<8x128xi1>, vector<8x128xf32>
    %118 = arith.addf %111, %117 : vector<8x128xf32>
    %c4_i32 = arith.constant 4 : i32
    %119 = vector.broadcast %c4_i32 : i32 to vector<8x128xi32>
    %120 = arith.cmpi eq, %89, %119 : vector<8x128xi32>
    %cst_37 = arith.constant 0.000000e+00 : f32
    %121 = vector.shape_cast %87 : vector<1x1xf32> to vector<1x1xf32>
    %122 = vector.broadcast %121 : vector<1x1xf32> to vector<8x128xf32>
    %123 = vector.broadcast %cst_37 : f32 to vector<8x128xf32>
    %124 = arith.select %120, %122, %123 : vector<8x128xi1>, vector<8x128xf32>
    %125 = arith.addf %118, %124 : vector<8x128xf32>
    %c5_i32 = arith.constant 5 : i32
    %126 = vector.broadcast %c5_i32 : i32 to vector<8x128xi32>
    %127 = arith.cmpi eq, %89, %126 : vector<8x128xi32>
    %cst_38 = arith.constant 0.000000e+00 : f32
    %128 = vector.shape_cast %88 : vector<1x1xf32> to vector<1x1xf32>
    %129 = vector.broadcast %128 : vector<1x1xf32> to vector<8x128xf32>
    %130 = vector.broadcast %cst_38 : f32 to vector<8x128xf32>
    %131 = arith.select %127, %129, %130 : vector<8x128xi1>, vector<8x128xf32>
    %132 = arith.addf %125, %131 : vector<8x128xf32>
    %133 = vector.shape_cast %132 : vector<8x128xf32> to vector<1x8x128xf32>
    %c0_39 = arith.constant 0 : index
    %c0_40 = arith.constant 0 : index
    %c0_41 = arith.constant 0 : index
    %134 = vector.load %arg5[%c0_39, %c0_40, %c0_41] : memref<1x8x128xf32, #tpu.memory_space<vmem>>, vector<1x8x128xf32>
    tpu.vector_store %arg5[%c0_39, %c0_40, %c0_41], %133 {strides = array<i32>} : memref<1x8x128xf32, #tpu.memory_space<vmem>>, vector<1x8x128xf32>,
    return
  }
  func.func @transform_0(%arg0: i32, %arg1: memref<1xi32, #tpu.memory_space<smem>>) -> (i32, i32) {
    %c0_i32 = arith.constant 0 : i32
    %c0_i32_0 = arith.constant 0 : i32
    return %arg0, %c0_i32 : i32, i32
  }
  func.func @transform_1(%arg0: i32, %arg1: memref<1xi32, #tpu.memory_space<smem>>) -> (i32, i32) {
    %c0_i32 = arith.constant 0 : i32
    %c0_i32_0 = arith.constant 0 : i32
    return %arg0, %c0_i32 : i32, i32
  }
  func.func @transform_2(%arg0: i32, %arg1: memref<1xi32, #tpu.memory_space<smem>>) -> (i32, i32) {
    %c0_i32 = arith.constant 0 : i32
    %c0_i32_0 = arith.constant 0 : i32
    return %arg0, %c0_i32 : i32, i32
  }
  func.func @transform_3(%arg0: i32, %arg1: memref<1xi32, #tpu.memory_space<smem>>) -> (i32, i32, i32) {
    %c0_i32 = arith.constant 0 : i32
    %c0_i32_0 = arith.constant 0 : i32
    %c0_i32_1 = arith.constant 0 : i32
    return %arg0, %c0_i32, %c0_i32_0 : i32, i32, i32
  }
}

</mosaic_0001>

<llo_original>
// kernel: tpu_custom_call.1
$region0: #{tpu_custom_call.1}
  #allocation0 [shape = 'u32[]', space=smem, size = 0x4, offset = 0x4, fixed_abs, tag = 'smem constant byte address 0x4 - core index']
  #allocation1 [shape = 'u32[144,128]{1,0:T(1,128)}', space=vmem, size = 0x12000, scoped, tag = 'internal scratch']
  #allocation2 [shape = 's32[1]{0}', space=sflag, size = 0x4, scoped, tag = 'scoped memory for tpu_custom_call.1']
  #allocation3 [shape = 's32[1]{0:T(128)S(6)}', space=smem, size = 0x200, scoped, tag = 'prefetched SMEM operand 0']
  %s0 = inlined_call_operand.<no memory space> [shape: s32[1], index: 0, kind: input, shape index: {}]
  %s1 = inlined_call_operand.vmem [shape: f32[24,32], index: 1, kind: input, shape index: {}]
  %s2 = inlined_call_operand.hbm [shape: f32[24,32], index: 2, kind: input, shape index: {}]
  %s3 = inlined_call_operand.vmem [shape: f32[24,1], index: 3, kind: input, shape index: {}]
  %s4 = inlined_call_operand.hbm [shape: f32[3,8,128], index: 4, kind: output, shape index: {}]
  %s5 = sld [smem:[#allocation0]]
  $region49: #{tpu_custom_call.1} parent=0
    _
  %s7 = ssub.s32 1, %s5
  %s8 = scalar_select 0, %s7, %s5
  %9 = sst [smem:[#allocation3]] %s0
  $region1: #{tpu_custom_call.1} parent=0
    #allocation4 [shape = 'u8[8192]{0}', space=vmem, size = 0x2000, scoped, tag = 'input window, operand 2']
    #allocation5 [shape = 's32[2]{0}', space=sflag, size = 0x8, scoped, tag = 'scoped memory for tpu_custom_call.1']
    #allocation6 [shape = 's32[2]{0}', space=sflag, size = 0x8, scoped, tag = 'scoped memory for tpu_custom_call.1']
    #allocation7 [shape = 'u8[8192]{0}', space=vmem, size = 0x2000, scoped, tag = 'output window, operand 0']
    %10 = vsyncpa [#allocation5], 0
    %s11 = scalar_lea.sflag [#allocation5], 1
    %12 = vsyncpa %s11, 0
    %13 = vsyncpa [#allocation6], 0
    %s14 = scalar_lea.sflag [#allocation6], 1
    %15 = vsyncpa %s14, 0
    loop: start=0, step=1, limit=5
    $region2: #{tpu_custom_call.1} parent=1 // loop_pre_header
      _
    $region3: #{tpu_custom_call.1} parent=1 // loop_header
      %s17 = sphi 0, %s21
      %p18 = scmp.ge.s32.totalorder %s17, 5
      %s27 = sphi 0, %s29
      %s30 = sphi 0, %s27
      %s31 = sphi 0, %s30
      %s47 = sphi 0, %s31
      %s53 = sphi 0, %s55
      %s56 = sphi 0, %s53
      %s57 = sphi 0, %s56
      %s73 = sphi 0, %s57
      %s79 = sphi 0, %s81
      %s82 = sphi 0, %s79
      %s83 = sphi 0, %s82
      %s99 = sphi 0, %s83
      %s105 = sphi 0, %s107
      %s108 = sphi 0, %s105
      %s109 = sphi 0, %s108
      %s125 = sphi 0, %s109
    $region4: #{tpu_custom_call.1} parent=1 // loop_header_branch
      %20 = sbr.rel (%p18) target = $region8
    $region5: #{tpu_custom_call.1} parent=1 // loop_body
      %s22 = ssub.s32 %s17, 1
      %s23 = ssub.s32 %s17, 2
      %s24 = sadd.s32 %s17, 1
      %s25 = ssub.s32 %s17, %s24
      %p26 = scmp.eq.s32.totalorder %s25, 0
      %s28 = sadd.s32 %s27, 1
      %s29 = scalar_select %p26, %s27, %s28
      %p32 = pneg %p26
      %p33 = scmp.eq.s32.totalorder %s17, 2
      %p34 = por %p32, %p33
      %p35 = scmp.ne.s32.totalorder %s27, %s30
      %p36 = scmp.eq.s32.totalorder %s17, 0
      %p37 = por %p35, %p36
      %p38 = scmp.ne.s32.totalorder %s27, %s30
      %p39 = scmp.eq.s32.totalorder %s22, 2
      %p40 = por %p38, %p39
      %p41 = scmp.ne.s32.totalorder %s30, %s31
      %p42 = scmp.eq.s32.totalorder %s22, 0
      %p43 = por %p41, %p42
      %p44 = scmp.ne.s32.totalorder %s30, %s31
      %p45 = scmp.eq.s32.totalorder %s23, 2
      %p46 = por %p44, %p45
      %p48 = scmp.ne.s32.totalorder %s31, %s47
      %p49 = scmp.eq.s32.totalorder %s23, 0
      %p50 = por %p48, %p49
      %s51 = ssub.s32 %s17, %s24
      %p52 = scmp.eq.s32.totalorder %s51, 0
      %s54 = sadd.s32 %s53, 1
      %s55 = scalar_select %p52, %s53, %s54
      %p58 = pneg %p52
      %p59 = scmp.eq.s32.totalorder %s17, 2
      %p60 = por %p58, %p59
      %p61 = scmp.ne.s32.totalorder %s53, %s56
      %p62 = scmp.eq.s32.totalorder %s17, 0
      %p63 = por %p61, %p62
      %p64 = scmp.ne.s32.totalorder %s53, %s56
      %p65 = scmp.eq.s32.totalorder %s22, 2
      %p66 = por %p64, %p65
      %p67 = scmp.ne.s32.totalorder %s56, %s57
      %p68 = scmp.eq.s32.totalorder %s22, 0
      %p69 = por %p67, %p68
      %p70 = scmp.ne.s32.totalorder %s56, %s57
      %p71 = scmp.eq.s32.totalorder %s23, 2
      %p72 = por %p70, %p71
      %p74 = scmp.ne.s32.totalorder %s57, %s73
      %p75 = scmp.eq.s32.totalorder %s23, 0
      %p76 = por %p74, %p75
      %s77 = ssub.s32 %s17, %s24
      %p78 = scmp.eq.s32.totalorder %s77, 0
      %s80 = sadd.s32 %s79, 1
      %s81 = scalar_select %p78, %s79, %s80
      %p84 = pneg %p78
      %p85 = scmp.eq.s32.totalorder %s17, 2
      %p86 = por %p84, %p85
      %p87 = scmp.ne.s32.totalorder %s79, %s82
      %p88 = scmp.eq.s32.totalorder %s17, 0
      %p89 = por %p87, %p88
      %p90 = scmp.ne.s32.totalorder %s79, %s82
      %p91 = scmp.eq.s32.totalorder %s22, 2
      %p92 = por %p90, %p91
      %p93 = scmp.ne.s32.totalorder %s82, %s83
      %p94 = scmp.eq.s32.totalorder %s22, 0
      %p95 = por %p93, %p94
      %p96 = scmp.ne.s32.totalorder %s82, %s83
      %p97 = scmp.eq.s32.totalorder %s23, 2
      %p98 = por %p96, %p97
      %p100 = scmp.ne.s32.totalorder %s83, %s99
      %p101 = scmp.eq.s32.totalorder %s23, 0
      %p102 = por %p100, %p101
      %s103 = ssub.s32 %s17, %s24
      %p104 = scmp.eq.s32.totalorder %s103, 0
      %s106 = sadd.s32 %s105, 1
      %s107 = scalar_select %p104, %s105, %s106
      %p110 = pneg %p104
      %p111 = scmp.eq.s32.totalorder %s17, 2
      %p112 = por %p110, %p111
      %p113 = scmp.ne.s32.totalorder %s105, %s108
      %p114 = scmp.eq.s32.totalorder %s17, 0
      %p115 = por %p113, %p114
      %p116 = scmp.ne.s32.totalorder %s105, %s108
      %p117 = scmp.eq.s32.totalorder %s22, 2
      %p118 = por %p116, %p117
      %p119 = scmp.ne.s32.totalorder %s108, %s109
      %p120 = scmp.eq.s32.totalorder %s22, 0
      %p121 = por %p119, %p120
      %p122 = scmp.ne.s32.totalorder %s108, %s109
      %p123 = scmp.eq.s32.totalorder %s23, 2
      %p124 = por %p122, %p123
      %p126 = scmp.ne.s32.totalorder %s109, %s125
      %p127 = scmp.eq.s32.totalorder %s23, 0
      %p128 = por %p126, %p127
      %p129 = scmp.le.s32.totalorder 1, %s17
      %p130 = scmp.lt.s32.totalorder %s17, 4
      %p131 = pnand %p129, %p130
      %p132 = pneg %p131
      // Predicated region
      $region9: #{tpu_custom_call.1} parent=5 // pred_check
        _
      $region10: #{tpu_custom_call.1} parent=5 // pred_check_branch
        %134 = sbr.rel (%p131) target = $region12
      $region11: #{tpu_custom_call.1} parent=5 // pred_region
        %s135 = ssub.s32 %s17, 1
      $region12: #{tpu_custom_call.1} parent=5 // pred_fallthru
        _
      %p136 = scmp.lt.s32.totalorder %s17, 3
      // Predicated region
      $region13: #{tpu_custom_call.1} parent=5 // pred_check
        %p137 = pneg %p136
      $region14: #{tpu_custom_call.1} parent=5 // pred_check_branch
        %139 = sbr.rel (%p137) target = $region16
      $region15: #{tpu_custom_call.1} parent=5 // pred_region
        // Predicated region
        $region17: #{tpu_custom_call.1} parent=15 // pred_check
          %p140 = pneg %p37
        $region18: #{tpu_custom_call.1} parent=15 // pred_check_branch
          %142 = sbr.rel (%p140) target = $region20
        $region19: #{tpu_custom_call.1} parent=15 // pred_region
          %p143 = scmp.lt.s32.totalorder %s17, 2
          %s144 = scalar_select %p143, %s17, 2
          %s145 = smul.addr %s144, 8
          %s146 = scalar_lea.vmem %s1, %s145
        $region20: #{tpu_custom_call.1} parent=15 // pred_fallthru
          _
        // Predicated region
        $region21: #{tpu_custom_call.1} parent=15 // pred_check
          %p147 = pneg %p63
        $region22: #{tpu_custom_call.1} parent=15 // pred_check_branch
          %149 = sbr.rel (%p147) target = $region24
        $region23: #{tpu_custom_call.1} parent=15 // pred_region
          %s150 = sand.u32 %s53, 1
          %s151 = scalar_lea.sflag [#allocation5], %s150
          %s152 = sand.u32 %s53, 1
          %s153 = smul.addr %s152, 8
          %s154 = scalar_lea.vmem [#allocation4], %s153
          %s156 = ssub.s32 128, 128
          %157 = vsyncadd %s151, %s156
          %s158 = smul.addr %s17, 128
          %s159 = scalar_lea.hbm %s2, %s158
          %s161 = sshll.u32 %s154, 4
          %s162 = int_to_ptr.vmem [resolvable:$true] %s161
          %164 = dma.hbm_to_vmem [thread:$0]  %s159, 128, %s162, %s151
        $region24: #{tpu_custom_call.1} parent=15 // pred_fallthru
          _
        // Predicated region
        $region25: #{tpu_custom_call.1} parent=15 // pred_check
          %p165 = pneg %p89
        $region26: #{tpu_custom_call.1} parent=15 // pred_check_branch
          %167 = sbr.rel (%p165) target = $region28
        $region27: #{tpu_custom_call.1} parent=15 // pred_region
          %p168 = scmp.lt.s32.totalorder %s17, 2
          %s169 = scalar_select %p168, %s17, 2
          %s170 = smul.addr %s169, 8
          %s171 = scalar_lea.vmem %s3, %s170
        $region28: #{tpu_custom_call.1} parent=15 // pred_fallthru
          _
      $region16: #{tpu_custom_call.1} parent=5 // pred_fallthru
        _
      %p172 = scmp.le.s32.totalorder 1, %s17
      %p173 = scmp.lt.s32.totalorder %s17, 4
      %p174 = pnand %p172, %p173
      %p175 = pneg %p174
      // Predicated region
      $region29: #{tpu_custom_call.1} parent=5 // pred_check
        _
      $region30: #{tpu_custom_call.1} parent=5 // pred_check_branch
        %177 = sbr.rel (%p174) target = $region32
      $region31: #{tpu_custom_call.1} parent=5 // pred_region
        %s178 = ssub.s32 %s17, 1
        %s179 = sand.u32 %s56, 1
        %s180 = scalar_lea.sflag [#allocation5], %s179
        %s181 = sand.u32 %s56, 1
        %s182 = smul.addr %s181, 8
        %s183 = scalar_lea.vmem [#allocation4], %s182
        // Predicated region
        $region33: #{tpu_custom_call.1} parent=31 // pred_check
          %p184 = pneg %p69
        $region34: #{tpu_custom_call.1} parent=31 // pred_check_branch
          %186 = sbr.rel (%p184) target = $region36
        $region35: #{tpu_custom_call.1} parent=31 // pred_region
          %187 = dma.done %s180, 128
        $region36: #{tpu_custom_call.1} parent=31 // pred_fallthru
          _
        %p188 = scmp.lt.s32.totalorder %s22, 2
        %s189 = scalar_select %p188, %s22, 2
        %s190 = smul.addr %s189, 8
        %s191 = scalar_lea.vmem %s1, %s190
        %p192 = pneg %p43
        %p193 = pneg %p40
        %s194 = sand.u32 %s56, 1
        %s195 = scalar_lea.sflag [#allocation5], %s194
        %s196 = sand.u32 %s56, 1
        %s197 = smul.addr %s196, 8
        %s198 = scalar_lea.vmem [#allocation4], %s197
        %p199 = pneg %p69
        %p200 = pneg %p66
        %p201 = scmp.lt.s32.totalorder %s22, 2
        %s202 = scalar_select %p201, %s22, 2
        %s203 = smul.addr %s202, 8
        %s204 = scalar_lea.vmem %s3, %s203
        %p205 = pneg %p95
        %p206 = pneg %p92
        %p207 = pneg %p121
        %p208 = pneg %p118
        %s209 = sand.u32 %s108, 1
        %s210 = scalar_lea.sflag [#allocation6], %s209
        %s211 = sand.u32 %s108, 1
        %s212 = smul.addr %s211, 8
        %s213 = scalar_lea.vmem [#allocation7], %s212
        %p214 = scmp.lt.s32.totalorder %s22, 2
        %s215 = scalar_select %p214, %s22, 2
        %s216 = smul.addr %s215, 8
        %s217 = scalar_lea.vmem %s1, %s216
        %p218 = scmp.lt.s32.totalorder %s22, 2
        %s219 = scalar_select %p218, %s22, 2
        %s220 = smul.addr %s219, 8
        %s221 = scalar_lea.vmem %s3, %s220
        %s222 = sld [smem:[#allocation3]]
        %s223 = smul.u32 %s22, 8
        %v224 = vld [vmem:[%s217] sm:$0xff]
        %v225 = vld [vmem:[%s183] sm:$0xff]
        %v226 = vld [vmem:[%s221] sm:$0xff]
        %s227 = sadd.s32 %s223, 0
        %v228 = vlaneseq
        %v229 = vshrl.u32 %v228, 7
        %v230 = vstv %s227
        %v231 = vadd.s32 %v230, %v229
        %v232 = vstv %s222
        %vm233 = vcmp.lt.s32.totalorder %v231, %v232
        %v234 = vsel %vm233, 1, 0
        %v235 = vcvt.s32.f32 %v234
        %v236 = vsub.f32 %v224, %v225
        %v237 = vadd.f32 %v236, 1e-06
        %v238 = vmul.f32 %v237, %v237
        %vm239 = vcmask 261120
        %v240 = vsel %vm239, %v238, 0.0
        %241 = vadd.xlane.f32.xlu0 %v240
        %v242 = vpop.xlane.xlu0 %241
        %v243 = vrsqrt.pop %v242
        %v244 = vmul.f32 %v242, %v243
        %vm245 = vcmp.eq.f32.partialorder %v242, inf
        %v246 = vsel %vm245, %v242, %v244
        %vm247 = vcmp.eq.f32.partialorder %v242, 0.0
        %v248 = vand.u32 %v242, 2147483648
        %v249 = vsel %vm247, %v248, %v246
        %v250 = vmul.f32 %v224, %v225
        %v251 = vsel %vm239, %v250, 0.0
        %252 = vadd.xlane.f32.xlu0 %v251
        %v253 = vpop.xlane.xlu0 %252
        %v254 = vmul.f32 %v224, %v224
        %v255 = vsel %vm239, %v254, 0.0
        %256 = vadd.xlane.f32.xlu0 %v255
        %v257 = vpop.xlane.xlu0 %256
        %v258 = vmul.f32 %v225, %v225
        %v259 = vsel %vm239, %v258, 0.0
        %260 = vadd.xlane.f32.xlu0 %v259
        %v261 = vpop.xlane.xlu0 %260
        %v262 = vmax.f32 %v257, 1e-16
        %v263 = vrsqrt.pop %v262
        %v264 = vmul.f32 %v253, %v263
        %v265 = vmax.f32 %v261, 1e-16
        %v266 = vrsqrt.pop %v265
        %v267 = vmul.f32 %v264, %v266
        %vm268 = vcmp.ne.f32.partialorder %v226, 0.0
        %v269 = vsel %vm268, %v235, 0.0
        %v270 = vsub.f32 %v235, %v269
        %vm271 = vcmp.lt.f32.partialorder %v249, 1.0
        %v272 = vsel %vm271, %v270, 0.0
        %v273 = vmul.f32 %v249, %v269
        %vm274 = vcmask 7168
        %v275 = vsel %vm274, %v273, 0.0
        %v276 = vrot.slane %v275, 4
        %v277 = vadd.f32 %v275, %v276
        %v278 = vrot.slane %v277, 2
        %v279 = vadd.f32 %v277, %v278
        %v280 = vrot.slane %v279, 1
        %v281 = vadd.f32 %v279, %v280
        %v282 = vsub.f32 %v267, 0.9
        %v283 = vmax.f32 %v282, 0.0
        %v284 = vmul.f32 %v283, %v269
        %v285 = vsel %vm274, %v284, 0.0
        %v286 = vrot.slane %v285, 4
        %v287 = vadd.f32 %v285, %v286
        %v288 = vrot.slane %v287, 2
        %v289 = vadd.f32 %v287, %v288
        %v290 = vrot.slane %v289, 1
        %v291 = vadd.f32 %v289, %v290
        %v292 = vsel %vm274, %v269, 0.0
        %v293 = vrot.slane %v292, 4
        %v294 = vadd.f32 %v292, %v293
        %v295 = vrot.slane %v294, 2
        %v296 = vadd.f32 %v294, %v295
        %v297 = vrot.slane %v296, 1
        %v298 = vadd.f32 %v296, %v297
        %v299 = vsub.f32 1.0, %v249
        %v300 = vmul.f32 %v299, %v272
        %v301 = vsel %vm274, %v300, 0.0
        %v302 = vrot.slane %v301, 4
        %v303 = vadd.f32 %v301, %v302
        %v304 = vrot.slane %v303, 2
        %v305 = vadd.f32 %v303, %v304
        %v306 = vrot.slane %v305, 1
        %v307 = vadd.f32 %v305, %v306
        %v308 = vsel %vm274, %v272, 0.0
        %v309 = vrot.slane %v308, 4
        %v310 = vadd.f32 %v308, %v309
        %v311 = vrot.slane %v310, 2
        %v312 = vadd.f32 %v310, %v311
        %v313 = vrot.slane %v312, 1
        %v314 = vadd.f32 %v312, %v313
        %v315 = vsub.f32 0.3, %v267
        %v316 = vmax.f32 %v315, 0.0
        %v317 = vmul.f32 %v316, %v270
        %v318 = vsel %vm274, %v317, 0.0
        %v319 = vrot.slane %v318, 4
        %v320 = vadd.f32 %v318, %v319
        %v321 = vrot.slane %v320, 2
        %v322 = vadd.f32 %v320, %v321
        %v323 = vrot.slane %v322, 1
        %v324 = vadd.f32 %v322, %v323
        %v325 = vadd.f32 %v281, 0.0
        %v326 = vadd.f32 %v291, 0.0
        %v327 = vadd.f32 %v298, 0.0
        %v328 = vadd.f32 %v307, 0.0
        %v329 = vadd.f32 %v314, 0.0
        %v330 = vadd.f32 %v324, 0.0
        %v331 = vlaneseq
        %v332 = vand.u32 %v331, 127
        %vm333 = vcmp.eq.s32.totalorder %v332, 0
        %335 = vset.pattern.permute.xlu0 0
        %336 = vperm.xlu0 %335, %v325
        %v337 = vpop.permute.xlu0 %336
        %v339 = vsel %vm333, %v337, 0.0
        %v340 = vadd.f32 %v339, 0.0
        %vm341 = vcmp.eq.s32.totalorder %v332, 1
        %343 = vset.pattern.permute.xlu0 0
        %344 = vperm.xlu0 %343, %v326
        %v345 = vpop.permute.xlu0 %344
        %v347 = vsel %vm341, %v345, 0.0
        %v348 = vadd.f32 %v340, %v347
        %vm349 = vcmp.eq.s32.totalorder %v332, 2
        %351 = vset.pattern.permute.xlu0 0
        %352 = vperm.xlu0 %351, %v327
        %v353 = vpop.permute.xlu0 %352
        %v355 = vsel %vm349, %v353, 0.0
        %v356 = vadd.f32 %v348, %v355
        %vm357 = vcmp.eq.s32.totalorder %v332, 3
        %359 = vset.pattern.permute.xlu0 0
        %360 = vperm.xlu0 %359, %v328
        %v361 = vpop.permute.xlu0 %360
        %v363 = vsel %vm357, %v361, 0.0
        %v364 = vadd.f32 %v356, %v363
        %vm365 = vcmp.eq.s32.totalorder %v332, 4
        %367 = vset.pattern.permute.xlu0 0
        %368 = vperm.xlu0 %367, %v329
        %v369 = vpop.permute.xlu0 %368
        %v371 = vsel %vm365, %v369, 0.0
        %v372 = vadd.f32 %v364, %v371
        %vm373 = vcmp.eq.s32.totalorder %v332, 5
        %375 = vset.pattern.permute.xlu0 0
        %376 = vperm.xlu0 %375, %v330
        %v377 = vpop.permute.xlu0 %376
        %v379 = vsel %vm373, %v377, 0.0
        %v380 = vadd.f32 %v372, %v379
        %381 = vst [vmem:[%s213] sm:$0xff] %v380
        %s382 = sand.u32 %s108, 1
        %s383 = scalar_lea.sflag [#allocation6], %s382
        %s384 = sand.u32 %s108, 1
        %s385 = smul.addr %s384, 8
        %s386 = scalar_lea.vmem [#allocation7], %s385
        // Predicated region
        $region37: #{tpu_custom_call.1} parent=31 // pred_check
          %p387 = pneg %p118
        $region38: #{tpu_custom_call.1} parent=31 // pred_check_branch
          %389 = sbr.rel (%p387) target = $region40
        $region39: #{tpu_custom_call.1} parent=31 // pred_region
          %s391 = ssub.s32 128, 128
          %392 = vsyncadd %s383, %s391
          %s393 = smul.addr %s22, 128
          %s394 = scalar_lea.hbm %s4, %s393
          %s396 = sshll.u32 %s386, 4
          %s397 = int_to_ptr.vmem [resolvable:$true] %s396
          %399 = dma.vmem_to_hbm [thread:$0]  %s397, 128, %s394, %s383
        $region40: #{tpu_custom_call.1} parent=31 // pred_fallthru
          _
      $region32: #{tpu_custom_call.1} parent=5 // pred_fallthru
        _
      %p400 = scmp.le.s32.totalorder 2, %s17
      // Predicated region
      $region41: #{tpu_custom_call.1} parent=5 // pred_check
        %p401 = pneg %p400
      $region42: #{tpu_custom_call.1} parent=5 // pred_check_branch
        %403 = sbr.rel (%p401) target = $region44
      $region43: #{tpu_custom_call.1} parent=5 // pred_region
        %s404 = ssub.s32 %s17, 2
        // Predicated region
        $region45: #{tpu_custom_call.1} parent=43 // pred_check
          %p405 = pneg %p124
        $region46: #{tpu_custom_call.1} parent=43 // pred_check_branch
          %407 = sbr.rel (%p405) target = $region48
        $region47: #{tpu_custom_call.1} parent=43 // pred_region
          %s408 = sand.u32 %s109, 1
          %s409 = scalar_lea.sflag [#allocation6], %s408
          %s410 = sand.u32 %s109, 1
          %s411 = smul.addr %s410, 8
          %s412 = scalar_lea.vmem [#allocation7], %s411
          %413 = dma.done %s409, 128
        $region48: #{tpu_custom_call.1} parent=43 // pred_fallthru
          _
      $region44: #{tpu_custom_call.1} parent=5 // pred_fallthru
        _
    $region6: #{tpu_custom_call.1} parent=1 // loop_footer
      %s21 = sadd.s32 1, %s17
    $region7: #{tpu_custom_call.1} parent=1 // loop_footer_branch
      %16 = sbr.rel target = $region3
    $region8: #{tpu_custom_call.1} parent=1 // loop_exit
      _
    %414 = vsyncpa [#allocation5], 1
    %s415 = scalar_lea.sflag [#allocation5], 1
    %416 = vsyncpa %s415, 1
    %417 = vsyncpa [#allocation6], 1
    %s418 = scalar_lea.sflag [#allocation6], 1
    %419 = vsyncpa %s418, 1

</llo_original>
